<compile_context>
chip_gen: v7x
topology: tpu7x:2x2x1
jax: 0.10.0
libtpu: 0.0.40
codegen_flags: <defaults>
</compile_context>

<pallas_src>
import math

import numpy as np
import jax
import jax.numpy as jnp
from jax import lax
from jax.experimental import pallas as pl
from jax.experimental.pallas import tpu as pltpu


# ---------------------------------------------------------------------------
# helpers
# ---------------------------------------------------------------------------
def _round_up(x, m):
    return ((x + m - 1) // m) * m


def _pick_tile(dim, max_tile, align):
    """Largest tile <= max_tile that is a multiple of `align` and divides
    round_up(dim, align). Returns (tile, padded_dim)."""
    d = _round_up(dim, align)
    best = align
    t = align
    while t <= max_tile:
        if d % t == 0:
            best = t
        t += align
    return best, d


# ---------------------------------------------------------------------------
# Generic tiled matmul: out = act(lhs_act(x) @ w + b)
# ---------------------------------------------------------------------------
def _make_matmul_kernel(activation, lhs_silu):
    def kernel(x_ref, w_ref, b_ref, o_ref, acc_ref):
        k = pl.program_id(2)

        @pl.when(k == 0)
        def _():
            acc_ref[...] = jnp.zeros_like(acc_ref)

        x = x_ref[...]
        if lhs_silu:
            x = x * jax.nn.sigmoid(x)
        acc_ref[...] += jnp.dot(x, w_ref[...],
                                preferred_element_type=jnp.float32)

        @pl.when(k == pl.num_programs(2) - 1)
        def _():
            out = acc_ref[...] + b_ref[...]
            if activation == "gelu_tanh":
                out = jax.nn.gelu(out, approximate=True)
            o_ref[...] = out.astype(o_ref.dtype)

    return kernel


def matmul_bias(x, w, b, activation=None, lhs_silu=False):
    M, K = x.shape
    K2, N = w.shape
    assert K == K2 and b.shape == (N,)
    tm, M_pad = _pick_tile(M, 256, 8)
    tn, N_pad = _pick_tile(N, 512, 128)
    tk, K_pad = _pick_tile(K, 1024, 128)

    x_p = jnp.pad(x, ((0, M_pad - M), (0, K_pad - K)))
    w_p = jnp.pad(w, ((0, K_pad - K), (0, N_pad - N)))
    b_p = jnp.pad(b.reshape(1, N), ((0, 0), (0, N_pad - N)))

    grid = (M_pad // tm, N_pad // tn, K_pad // tk)
    out = pl.pallas_call(
        _make_matmul_kernel(activation, lhs_silu),
        out_shape=jax.ShapeDtypeStruct((M_pad, N_pad), x.dtype),
        grid=grid,
        in_specs=[
            pl.BlockSpec((tm, tk), lambda i, j, k: (i, k)),
            pl.BlockSpec((tk, tn), lambda i, j, k: (k, j)),
            pl.BlockSpec((1, tn), lambda i, j, k: (0, j)),
        ],
        out_specs=pl.BlockSpec((tm, tn), lambda i, j, k: (i, j)),
        scratch_shapes=[pltpu.VMEM((tm, tn), jnp.float32)],
        compiler_params=pltpu.CompilerParams(
            dimension_semantics=("parallel", "parallel", "arbitrary")),
    )(x_p, w_p, b_p)
    return out[:M, :N]


# ---------------------------------------------------------------------------
# AdaLN-Zero single (token replace): LayerNorm + per-region scale/shift
# ---------------------------------------------------------------------------
def _make_adaln_kernel(num_tokens, eps, ts):
    def kernel(x_ref, shift_ref, scale_ref, tr_shift_ref, tr_scale_ref, o_ref):
        x = x_ref[0]                                   # (ts, C)
        mean = jnp.mean(x, axis=-1, keepdims=True)
        xc = x - mean
        var = jnp.mean(xc * xc, axis=-1, keepdims=True)
        xn = xc * lax.rsqrt(var + eps)
        row = pl.program_id(1) * ts + lax.broadcasted_iota(jnp.int32, (ts, 1), 0)
        is_tr = row < num_tokens
        sc = jnp.where(is_tr, tr_scale_ref[0], scale_ref[0])
        sh = jnp.where(is_tr, tr_shift_ref[0], shift_ref[0])
        o_ref[0] = xn * (1.0 + sc) + sh

    return kernel


def adaln_token_replace(x, shift, scale, tr_shift, tr_scale, num_tokens, eps=1e-6):
    B, S, C = x.shape
    ts, S_pad = _pick_tile(S, 512, 8)
    x_p = jnp.pad(x, ((0, 0), (0, S_pad - S), (0, 0)))
    p3 = lambda t: t.reshape(B, 1, C)
    vec_spec = pl.BlockSpec((1, 1, C), lambda b, s: (b, 0, 0))
    out = pl.pallas_call(
        _make_adaln_kernel(num_tokens, eps, ts),
        out_shape=jax.ShapeDtypeStruct((B, S_pad, C), x.dtype),
        grid=(B, S_pad // ts),
        in_specs=[pl.BlockSpec((1, ts, C), lambda b, s: (b, s, 0)),
                  vec_spec, vec_spec, vec_spec, vec_spec],
        out_specs=pl.BlockSpec((1, ts, C), lambda b, s: (b, s, 0)),
        compiler_params=pltpu.CompilerParams(
            dimension_semantics=("parallel", "parallel")),
    )(x_p, p3(shift), p3(scale), p3(tr_shift), p3(tr_scale))
    return out[:, :S]


# ---------------------------------------------------------------------------
# Per-head RMSNorm + rotary embedding for q / k
# ---------------------------------------------------------------------------
def _make_qk_prep_kernel(eps):
    def kernel(x_ref, w_ref, cos_ref, sin_ref, rot_ref, o_ref):
        x = x_ref[0]                                   # (ts, D)
        inv = lax.rsqrt(jnp.mean(x * x, axis=-1, keepdims=True) + eps)
        xn = x * inv * w_ref[...]                      # RMSNorm with weight
        # pair rotation rot[2i] = -xn[2i+1], rot[2i+1] = xn[2i] via signed
        # permutation matrix on the (otherwise idle) MXU.
        x_rot = jnp.dot(xn, rot_ref[...], preferred_element_type=jnp.float32)
        o_ref[0] = xn * cos_ref[...] + x_rot * sin_ref[...]

    return kernel


def rmsnorm_rope(x, rms_weight, cos, sin, eps=1e-6):
    BH, S_pad, D = x.shape
    ts = next(t for t in (512, 256, 128, 8) if S_pad % t == 0)
    R = np.zeros((D, D), dtype=np.float32)
    idx = np.arange(D // 2)
    R[2 * idx + 1, 2 * idx] = -1.0
    R[2 * idx, 2 * idx + 1] = 1.0
    return pl.pallas_call(
        _make_qk_prep_kernel(eps),
        out_shape=jax.ShapeDtypeStruct((BH, S_pad, D), x.dtype),
        grid=(BH, S_pad // ts),
        in_specs=[
            pl.BlockSpec((1, ts, D), lambda b, s: (b, s, 0)),
            pl.BlockSpec((1, D), lambda b, s: (0, 0)),
            pl.BlockSpec((ts, D), lambda b, s: (s, 0)),
            pl.BlockSpec((ts, D), lambda b, s: (s, 0)),
            pl.BlockSpec((D, D), lambda b, s: (0, 0)),
        ],
        out_specs=pl.BlockSpec((1, ts, D), lambda b, s: (b, s, 0)),
        compiler_params=pltpu.CompilerParams(
            dimension_semantics=("parallel", "parallel")),
    )(x, rms_weight.reshape(1, D), cos, sin, jnp.asarray(R))


# ---------------------------------------------------------------------------
# Flash attention (online softmax, padded keys masked)
# ---------------------------------------------------------------------------
def _make_attn_kernel(s_valid, tk, scale):
    def kernel(q_ref, k_ref, v_ref, o_ref, m_scr, l_scr, acc_scr):
        j = pl.program_id(2)

        @pl.when(j == 0)
        def _():
            m_scr[...] = jnp.full_like(m_scr, -jnp.inf)
            l_scr[...] = jnp.zeros_like(l_scr)
            acc_scr[...] = jnp.zeros_like(acc_scr)

        q = q_ref[0]
        k = k_ref[0]
        v = v_ref[0]
        s = lax.dot_general(q, k, (((1,), (1,)), ((), ())),
                            preferred_element_type=jnp.float32) * scale
        kv_idx = j * tk + lax.broadcasted_iota(jnp.int32, s.shape, 1)
        s = jnp.where(kv_idx < s_valid, s, -jnp.inf)

        m_prev = m_scr[...]
        m_new = jnp.maximum(m_prev, jnp.max(s, axis=-1, keepdims=True))
        alpha = jnp.exp(m_prev - m_new)
        p = jnp.exp(s - m_new)
        l_scr[...] = alpha * l_scr[...] + jnp.sum(p, axis=-1, keepdims=True)
        acc_scr[...] = alpha * acc_scr[...] + jnp.dot(
            p, v, preferred_element_type=jnp.float32)
        m_scr[...] = m_new

        @pl.when(j == pl.num_programs(2) - 1)
        def _():
            o_ref[0] = (acc_scr[...] / l_scr[...]).astype(o_ref.dtype)

    return kernel


def flash_attention(q, k, v, s_valid):
    BH, S_pad, D = q.shape
    t = next(x for x in (256, 128, 8) if S_pad % x == 0)
    scale = 1.0 / math.sqrt(D)
    grid = (BH, S_pad // t, S_pad // t)
    return pl.pallas_call(
        _make_attn_kernel(s_valid, t, scale),
        out_shape=jax.ShapeDtypeStruct((BH, S_pad, D), q.dtype),
        grid=grid,
        in_specs=[
            pl.BlockSpec((1, t, D), lambda b, i, j: (b, i, 0)),
            pl.BlockSpec((1, t, D), lambda b, i, j: (b, j, 0)),
            pl.BlockSpec((1, t, D), lambda b, i, j: (b, j, 0)),
        ],
        out_specs=pl.BlockSpec((1, t, D), lambda b, i, j: (b, i, 0)),
        scratch_shapes=[pltpu.VMEM((t, 1), jnp.float32),
                        pltpu.VMEM((t, 1), jnp.float32),
                        pltpu.VMEM((t, D), jnp.float32)],
        compiler_params=pltpu.CompilerParams(
            dimension_semantics=("parallel", "parallel", "arbitrary")),
    )(q, k, v)


# ---------------------------------------------------------------------------
# Token-replace gating + residual add
# ---------------------------------------------------------------------------
def _make_gate_kernel(num_tokens, ts):
    def kernel(p_ref, r_ref, g_ref, trg_ref, o_ref):
        row = pl.program_id(1) * ts + lax.broadcasted_iota(jnp.int32, (ts, 1), 0)
        g = jnp.where(row < num_tokens, trg_ref[0], g_ref[0])
        o_ref[0] = p_ref[0] * g + r_ref[0]

    return kernel


def gate_and_residual(proj, residual, gate, tr_gate, num_tokens):
    B, S, C = proj.shape
    ts, S_pad = _pick_tile(S, 512, 8)
    pad = ((0, 0), (0, S_pad - S), (0, 0))
    p3 = lambda t: t.reshape(B, 1, C)
    vec_spec = pl.BlockSpec((1, 1, C), lambda b, s: (b, 0, 0))
    out = pl.pallas_call(
        _make_gate_kernel(num_tokens, ts),
        out_shape=jax.ShapeDtypeStruct((B, S_pad, C), proj.dtype),
        grid=(B, S_pad // ts),
        in_specs=[pl.BlockSpec((1, ts, C), lambda b, s: (b, s, 0)),
                  pl.BlockSpec((1, ts, C), lambda b, s: (b, s, 0)),
                  vec_spec, vec_spec],
        out_specs=pl.BlockSpec((1, ts, C), lambda b, s: (b, s, 0)),
        compiler_params=pltpu.CompilerParams(
            dimension_semantics=("parallel", "parallel")),
    )(jnp.pad(proj, pad), jnp.pad(residual, pad), p3(gate), p3(tr_gate))
    return out[:, :S]


# ---------------------------------------------------------------------------
# Full block forward
# ---------------------------------------------------------------------------
def hunyuan_token_replace_single_block(params, hidden_states, encoder_hidden_states,
                                       temb, token_replace_emb, image_rotary_emb,
                                       num_tokens, num_heads):
    B, S_img, C = hidden_states.shape
    S_txt = encoder_hidden_states.shape[1]
    S = S_img + S_txt
    D = C // num_heads
    cos, sin = image_rotary_emb

    x = jnp.concatenate([hidden_states, encoder_hidden_states], axis=1)   # (B, S, C)
    residual = x

    # --- AdaLN modulation (SiLU fused into the matmul lhs) ---
    emb_in = jnp.concatenate([temb, token_replace_emb], axis=0)           # (2B, C)
    mod = matmul_bias(emb_in, params["w_mod"], params["b_mod"], lhs_silu=True)
    shift, scale, gate = jnp.split(mod[:B], 3, axis=1)
    tr_shift, tr_scale, tr_gate = jnp.split(mod[B:], 3, axis=1)

    norm_x = adaln_token_replace(x, shift, scale, tr_shift, tr_scale, num_tokens)
    flat = norm_x.reshape(B * S, C)

    # --- MLP branch (bias + GELU(tanh) fused epilogue) ---
    mlp = matmul_bias(flat, params["w_mlp"], params["b_mlp"], activation="gelu_tanh")

    # --- Attention branch: fused QKV projection ---
    w_qkv = jnp.concatenate([params["w_q"], params["w_k"], params["w_v"]], axis=1)
    b_qkv = jnp.concatenate([params["b_q"], params["b_k"], params["b_v"]], axis=0)
    qkv = matmul_bias(flat, w_qkv, b_qkv)                                 # (B*S, 3C)

    def to_heads(t):
        return (t.reshape(B, S, num_heads, D)
                 .transpose(0, 2, 1, 3)
                 .reshape(B * num_heads, S, D))

    q = to_heads(qkv[:, :C])
    k = to_heads(qkv[:, C:2 * C])
    v = to_heads(qkv[:, 2 * C:])

    S_pad = _round_up(S, 128)
    pad = ((0, 0), (0, S_pad - S), (0, 0))
    q = jnp.pad(q, pad)
    k = jnp.pad(k, pad)
    v = jnp.pad(v, pad)

    # Rotary tables over the padded sequence: identity rotation for text/pad rows.
    cos_full = jnp.concatenate([cos, jnp.ones((S_pad - S_img, D), cos.dtype)], axis=0)
    sin_full = jnp.concatenate([sin, jnp.zeros((S_pad - S_img, D), sin.dtype)], axis=0)

    q = rmsnorm_rope(q, params["rms_q"], cos_full, sin_full)
    k = rmsnorm_rope(k, params["rms_k"], cos_full, sin_full)

    attn = flash_attention(q, k, v, S)                                    # (B*H, S_pad, D)
    attn = (attn[:, :S, :]
            .reshape(B, num_heads, S, D)
            .transpose(0, 2, 1, 3)
            .reshape(B * S, C))

    # --- Output projection over [attn | mlp] ---
    cat = jnp.concatenate([attn, mlp], axis=-1)                           # (B*S, C+mlp)
    proj = matmul_bias(cat, params["w_out"], params["b_out"]).reshape(B, S, C)

    out = gate_and_residual(proj, residual, gate, tr_gate, num_tokens)

    return out[:, :S_img], out[:, S_img:]


# ---------------------------------------------------------------------------
# Pure-JAX reference (mirror of the PyTorch forward) for validation
# ---------------------------------------------------------------------------
def _reference(params, hidden_states, encoder_hidden_states, temb,
               token_replace_emb, cos, sin, num_tokens, num_heads):
    P = lax.Precision.HIGHEST
    B, S_img, C = hidden_states.shape
    S_txt = encoder_hidden_states.shape[1]
    S = S_img + S_txt
    D = C // num_heads
    eps = 1e-6

    x = jnp.concatenate([hidden_states, encoder_hidden_states], axis=1)
    residual = x

    def mod(e):
        return jnp.dot(jax.nn.silu(e), params["w_mod"], precision=P) + params["b_mod"]

    shift, scale, gate = jnp.split(mod(temb), 3, axis=1)
    tr_shift, tr_scale, tr_gate = jnp.split(mod(token_replace_emb), 3, axis=1)

    mean = x.mean(-1, keepdims=True)
    var = ((x - mean) ** 2).mean(-1, keepdims=True)
    xn = (x - mean) * lax.rsqrt(var + eps)
    norm_x = jnp.concatenate([
        xn[:, :num_tokens] * (1.0 + tr_scale[:, None]) + tr_shift[:, None],
        xn[:, num_tokens:] * (1.0 + scale[:, None]) + shift[:, None]], axis=1)

    mlp = jax.nn.gelu(
        jnp.dot(norm_x, params["w_mlp"], precision=P) + params["b_mlp"],
        approximate=True)

    def proj_heads(w, b):
        t = jnp.dot(norm_x, w, precision=P) + b
        return t.reshape(B, S, num_heads, D).transpose(0, 2, 1, 3)

    q = proj_heads(params["w_q"], params["b_q"])
    k = proj_heads(params["w_k"], params["b_k"])
    v = proj_heads(params["w_v"], params["b_v"])

    def rms(t, w):
        return t * lax.rsqrt(jnp.mean(t * t, -1, keepdims=True) + eps) * w

    q = rms(q, params["rms_q"])
    k = rms(k, params["rms_k"])

    def rope(t):
        t_img = t[:, :, :S_img]
        x_real = t_img[..., 0::2]
        x_imag = t_img[..., 1::2]
        t_rot = jnp.stack([-x_imag, x_real], axis=-1).reshape(t_img.shape)
        t_img = t_img * cos[None, None] + t_rot * sin[None, None]
        return jnp.concatenate([t_img, t[:, :, S_img:]], axis=2)

    q = rope(q)
    k = rope(k)

    scores = jnp.einsum("bhqd,bhkd->bhqk", q, k, precision=P) / math.sqrt(D)
    probs = jax.nn.softmax(scores, axis=-1)
    attn = jnp.einsum("bhqk,bhkd->bhqd", probs, v, precision=P)
    attn = attn.transpose(0, 2, 1, 3).reshape(B, S, C)

    cat = jnp.concatenate([attn, mlp], axis=-1)
    proj = jnp.dot(cat, params["w_out"], precision=P) + params["b_out"]

    out = jnp.concatenate([
        proj[:, :num_tokens] * tr_gate[:, None],
        proj[:, num_tokens:] * gate[:, None]], axis=1) + residual
    return out[:, :S_img], out[:, S_img:]


def _rotary_tables(rope_sizes, rope_dim, theta=256.0):
    grids = np.meshgrid(*[np.arange(s, dtype=np.float32) for s in rope_sizes],
                        indexing="ij")
    grids = [g.reshape(-1) for g in grids]
    coss, sins = [], []
    for g, d in zip(grids, rope_dim):
        inv = 1.0 / (theta ** (np.arange(0, d, 2)[: d // 2].astype(np.float32) / d))
        fr = np.outer(g, inv)
        coss.append(np.repeat(np.cos(fr), 2, axis=1))
        sins.append(np.repeat(np.sin(fr), 2, axis=1))
    return (jnp.asarray(np.concatenate(coss, axis=1)),
            jnp.asarray(np.concatenate(sins, axis=1)))


if __name__ == "__main__":
    key = jax.random.PRNGKey(0)
    num_heads = 2
    head_dim = 128
    C = num_heads * head_dim          # 256
    mlp_dim = int(C * 4.0)            # 1024
    B = 2
    rope_sizes = (1, 8, 8)            # T' x H' x W' latent grid -> 64 image tokens
    rope_dim = (16, 56, 56)           # sums to head_dim
    S_img = int(np.prod(rope_sizes))  # 64
    S_txt = 16
    num_tokens = 32                   # first-frame token count

    ks = jax.random.split(key, 18)
    r = lambda k, shp, s=0.1: jax.random.normal(k, shp, dtype=jnp.float32) * s

    params = {
        "w_mod": r(ks[0], (C, 3 * C)), "b_mod": r(ks[1], (3 * C,)),
        "w_q": r(ks[2], (C, C)), "b_q": r(ks[3], (C,)),
        "w_k": r(ks[4], (C, C)), "b_k": r(ks[5], (C,)),
        "w_v": r(ks[6], (C, C)), "b_v": r(ks[7], (C,)),
        "rms_q": 1.0 + r(ks[8], (head_dim,)),
        "rms_k": 1.0 + r(ks[9], (head_dim,)),
        "w_mlp": r(ks[10], (C, mlp_dim)), "b_mlp": r(ks[11], (mlp_dim,)),
        "w_out": r(ks[12], (C + mlp_dim, C)), "b_out": r(ks[13], (C,)),
    }

    hidden_states = jax.random.normal(ks[14], (B, S_img, C), dtype=jnp.float32)
    encoder_hidden_states = jax.random.normal(ks[15], (B, S_txt, C), dtype=jnp.float32)
    temb = jax.random.normal(ks[16], (B, C), dtype=jnp.float32)
    token_replace_emb = jax.random.normal(ks[17], (B, C), dtype=jnp.float32)

    cos, sin = _rotary_tables(rope_sizes, rope_dim)

    out_h, out_e = hunyuan_token_replace_single_block(
        params, hidden_states, encoder_hidden_states, temb, token_replace_emb,
        (cos, sin), num_tokens, num_heads)
    out_h = jax.block_until_ready(out_h)
    out_e = jax.block_until_ready(out_e)

    ref_h, ref_e = _reference(params, hidden_states, encoder_hidden_states, temb,
                              token_replace_emb, cos, sin, num_tokens, num_heads)

    assert out_h.shape == (B, S_img, C) and out_e.shape == (B, S_txt, C)
    np.testing.assert_allclose(np.asarray(out_h), np.asarray(ref_h),
                               rtol=1e-2, atol=1e-2)
    np.testing.assert_allclose(np.asarray(out_e), np.asarray(ref_e),
                               rtol=1e-2, atol=1e-2)
    print("KERNEL_OK")
</pallas_src>

<mosaic_0001>
module attributes {stable_mosaic.version = 11 : i64} {
  func.func @kernel(%arg0: i32, %arg1: i32, %arg2: i32, %arg3: memref<8x256xf32, #tpu.memory_space<vmem>>, %arg4: memref<256x384xf32, #tpu.memory_space<vmem>>, %arg5: memref<1x384xf32, #tpu.memory_space<vmem>>, %arg6: memref<8x384xf32, #tpu.memory_space<vmem>>, %arg7: memref<8x384xf32, #tpu.memory_space<vmem>>) attributes {dimension_semantics = [#tpu.dimension_semantics<parallel>, #tpu.dimension_semantics<parallel>, #tpu.dimension_semantics<arbitrary>], iteration_bounds = array<i64: 1, 2, 1>, scalar_prefetch = 0 : i64, scratch_operands = 1 : i64, tpu.core_type = #tpu.core_type<tc>, window_params = [{transform_indices = @transform_0, window_bounds = array<i64: 8, 256>}, {transform_indices = @transform_1, window_bounds = array<i64: 256, 384>}, {transform_indices = @transform_2, window_bounds = array<i64: 1, 384>}, {transform_indices = @transform_3, window_bounds = array<i64: 8, 384>}]} {
    %c0_i32 = arith.constant 0 : i32
    %0 = arith.cmpi eq, %arg2, %c0_i32 : i32
    %1 = arith.extui %0 : i1 to i32
    %c0_i32_0 = arith.constant 0 : i32
    %2 = arith.cmpi ne, %1, %c0_i32_0 : i32
    scf.if %2 {
      %cst_11 = arith.constant 0.000000e+00 : f32
      %18 = vector.broadcast %cst_11 : f32 to vector<8x384xf32>
      %c0_12 = arith.constant 0 : index
      %c0_13 = arith.constant 0 : index
      %19 = vector.load %arg7[%c0_12, %c0_13] : memref<8x384xf32, #tpu.memory_space<vmem>>, vector<8x384xf32>
      tpu.vector_store %arg7[%c0_12, %c0_13], %18 {strides = array<i32>} : memref<8x384xf32, #tpu.memory_space<vmem>>, vector<8x384xf32>,
    } else {
    }
    %c0 = arith.constant 0 : index
    %c0_1 = arith.constant 0 : index
    %3 = vector.load %arg3[%c0, %c0_1] : memref<8x256xf32, #tpu.memory_space<vmem>>, vector<8x256xf32>
    %4 = arith.negf %3 : vector<8x256xf32>
    %5 = math.exp %4 : vector<8x256xf32>
    %cst = arith.constant 1.000000e+00 : f32
    %6 = vector.broadcast %cst : f32 to vector<8x256xf32>
    %7 = arith.addf %6, %5 : vector<8x256xf32>
    %8 = arith.divf %6, %7 : vector<8x256xf32>
    %9 = arith.mulf %3, %8 : vector<8x256xf32>
    %c0_2 = arith.constant 0 : index
    %c0_3 = arith.constant 0 : index
    %10 = vector.load %arg7[%c0_2, %c0_3] : memref<8x384xf32, #tpu.memory_space<vmem>>, vector<8x384xf32>
    %c0_4 = arith.constant 0 : index
    %c0_5 = arith.constant 0 : index
    %11 = vector.load %arg4[%c0_4, %c0_5] : memref<256x384xf32, #tpu.memory_space<vmem>>, vector<256x384xf32>
    %cst_6 = arith.constant dense<0.000000e+00> : vector<8x384xf32>
    %12 = tpu.matmul %9, %11, %cst_6 {dimension_numbers = #tpu.dot_dimension_numbers<[1], [0], [0], [1], [0, 0, 1, 1], [], []>} : vector<8x256xf32>, vector<256x384xf32>, vector<8x384xf32> -> vector<8x384xf32>
    %13 = arith.addf %10, %12 : vector<8x384xf32>
    %c0_7 = arith.constant 0 : index
    %c0_8 = arith.constant 0 : index
    %14 = vector.load %arg7[%c0_7, %c0_8] : memref<8x384xf32, #tpu.memory_space<vmem>>, vector<8x384xf32>
    tpu.vector_store %arg7[%c0_7, %c0_8], %13 {strides = array<i32>} : memref<8x384xf32, #tpu.memory_space<vmem>>, vector<8x384xf32>,
    %c0_i32_9 = arith.constant 0 : i32
    %15 = arith.cmpi eq, %arg2, %c0_i32_9 : i32
    %16 = arith.extui %15 : i1 to i32
    %c0_i32_10 = arith.constant 0 : i32
    %17 = arith.cmpi ne, %16, %c0_i32_10 : i32
    scf.if %17 {
      %c0_11 = arith.constant 0 : index
      %c0_12 = arith.constant 0 : index
      %18 = vector.load %arg7[%c0_11, %c0_12] : memref<8x384xf32, #tpu.memory_space<vmem>>, vector<8x384xf32>
      %c0_13 = arith.constant 0 : index
      %c0_14 = arith.constant 0 : index
      %19 = vector.load %arg5[%c0_13, %c0_14] : memref<1x384xf32, #tpu.memory_space<vmem>>, vector<1x384xf32>
      %20 = vector.broadcast %19 : vector<1x384xf32> to vector<8x384xf32>
      %21 = arith.addf %18, %20 : vector<8x384xf32>
      %c0_15 = arith.constant 0 : index
      %c0_16 = arith.constant 0 : index
      %22 = vector.load %arg6[%c0_15, %c0_16] : memref<8x384xf32, #tpu.memory_space<vmem>>, vector<8x384xf32>
      tpu.vector_store %arg6[%c0_15, %c0_16], %21 {strides = array<i32>} : memref<8x384xf32, #tpu.memory_space<vmem>>, vector<8x384xf32>,
    } else {
    }
    return
  }
  func.func @transform_0(%arg0: i32, %arg1: i32, %arg2: i32) -> (i32, i32) {
    %c0_i32 = arith.constant 0 : i32
    return %arg0, %arg2 : i32, i32
  }
  func.func @transform_1(%arg0: i32, %arg1: i32, %arg2: i32) -> (i32, i32) {
    %c0_i32 = arith.constant 0 : i32
    return %arg2, %arg1 : i32, i32
  }
  func.func @transform_2(%arg0: i32, %arg1: i32, %arg2: i32) -> (i32, i32) {
    %c0_i32 = arith.constant 0 : i32
    %c0_i32_0 = arith.constant 0 : i32
    return %c0_i32, %arg1 : i32, i32
  }
  func.func @transform_3(%arg0: i32, %arg1: i32, %arg2: i32) -> (i32, i32) {
    %c0_i32 = arith.constant 0 : i32
    return %arg0, %arg1 : i32, i32
  }
}

</mosaic_0001>

<llo_original>
// kernel: tpu_custom_call.1
$region0: #{tpu_custom_call.1}
  #allocation0 [shape = 'u32[]', space=smem, size = 0x4, offset = 0x4, fixed_abs, tag = 'smem constant byte address 0x4 - core index']
  #allocation1 [shape = 'u32[144,128]{1,0:T(1,128)}', space=vmem, size = 0x12000, scoped, tag = 'internal scratch']
  #allocation2 [shape = 'f32[8,384]{1,0:T(8,128)}', space=vmem, size = 0x3000, scoped, tag = 'scratch operand']
  %s0 = inlined_call_operand.hbm [shape: f32[8,256], index: 0, kind: input, shape index: {}]
  %s1 = inlined_call_operand.hbm [shape: f32[256,768], index: 1, kind: input, shape index: {}]
  %s2 = inlined_call_operand.vmem [shape: f32[1,768], index: 2, kind: input, shape index: {}]
  %s3 = inlined_call_operand.hbm [shape: f32[8,768], index: 3, kind: output, shape index: {}]
  %s4 = sld [smem:[#allocation0]]
  $region61: #{tpu_custom_call.1} parent=0
    _
  %s6 = ssub.s32 1, %s4
  %s7 = scalar_select 0, %s6, %s4
  $region1: #{tpu_custom_call.1} parent=0
    #allocation3 [shape = 'u8[8192]{0}', space=vmem, size = 0x2000, scoped, tag = 'input window, operand 0, single buffered']
    #allocation4 [shape = 's32[2]{0}', space=sflag, size = 0x8, scoped, tag = 'scoped memory for tpu_custom_call.1']
    #allocation5 [shape = 's32[2]{0}', space=sflag, size = 0x8, scoped, tag = 'scoped memory for tpu_custom_call.1']
    #allocation6 [shape = 'u8[786432]{0}', space=vmem, size = 0xc0000, scoped, tag = 'input window, operand 1']
    #allocation7 [shape = 's32[2]{0}', space=sflag, size = 0x8, scoped, tag = 'scoped memory for tpu_custom_call.1']
    #allocation8 [shape = 'u8[24576]{0}', space=vmem, size = 0x6000, scoped, tag = 'output window, operand 0']
    %8 = vsyncpa [#allocation4], 0
    %9 = vsyncpa [#allocation7], 0
    %s10 = scalar_lea.sflag [#allocation7], 1
    %11 = vsyncpa %s10, 0
    %12 = vsyncpa [#allocation5], 0
    %s13 = scalar_lea.sflag [#allocation5], 1
    %14 = vsyncpa %s13, 0
    loop: start=0, step=1, limit=4
    $region2: #{tpu_custom_call.1} parent=1 // loop_pre_header
      _
    $region3: #{tpu_custom_call.1} parent=1 // loop_header
      %s16 = sphi 0, %s20
      %p17 = scmp.ge.s32.totalorder %s16, 4
      %s23 = sphi 0, %s42
      %s24 = sphi 0, %s38
      %s25 = sphi 0, %s34
      %s26 = sphi 0, %s23
      %s27 = sphi 0, %s24
      %s28 = sphi 0, %s25
      %s29 = sphi 0, %s26
      %s30 = sphi 0, %s27
      %s31 = sphi 0, %s28
      %s47 = sphi 0, %s49
      %s50 = sphi 0, %s47
      %s51 = sphi 0, %s50
      %s67 = sphi 0, %s51
      %s75 = sphi 0, %s77
      %s78 = sphi 0, %s75
      %s79 = sphi 0, %s78
      %s95 = sphi 0, %s79
      %s101 = sphi 0, %s103
      %s104 = sphi 0, %s101
      %s105 = sphi 0, %s104
      %s121 = sphi 0, %s105
      %s129 = sphi 0, %s131
      %s132 = sphi 0, %s129
      %s133 = sphi 0, %s132
      %s149 = sphi 0, %s133
    $region4: #{tpu_custom_call.1} parent=1 // loop_header_branch
      %19 = sbr.rel (%p17) target = $region8
    $region5: #{tpu_custom_call.1} parent=1 // loop_body
      %s21 = ssub.s32 %s16, 1
      %s22 = ssub.s32 %s16, 2
      %s32 = sadd.s32 1, %s25
      %p33 = scmp.ge.s32.totalorder %s32, 1
      %s34 = scalar_select %p33, 0, %s32
      %s35 = sadd.s32 1, %s24
      %s36 = scalar_select %p33, %s35, %s24
      %p37 = scmp.ge.s32.totalorder %s36, 2
      %s38 = scalar_select %p37, 0, %s36
      %s39 = sadd.s32 1, %s23
      %s40 = scalar_select %p37, %s39, %s23
      %p41 = scmp.ge.s32.totalorder %s40, 1
      %s42 = scalar_select %p41, 0, %s40
      %s43 = ssub.s32 %s23, %s42
      %s44 = ssub.s32 %s25, %s34
      %s45 = sor.u32 %s43, %s44
      %p46 = scmp.eq.s32.totalorder %s45, 0
      %s48 = sadd.s32 %s47, 1
      %s49 = scalar_select %p46, %s47, %s48
      %p52 = pneg %p46
      %p53 = scmp.eq.s32.totalorder %s16, 1
      %p54 = por %p52, %p53
      %p55 = scmp.ne.s32.totalorder %s47, %s50
      %p56 = scmp.eq.s32.totalorder %s16, 0
      %p57 = por %p55, %p56
      %p58 = scmp.ne.s32.totalorder %s47, %s50
      %p59 = scmp.eq.s32.totalorder %s21, 1
      %p60 = por %p58, %p59
      %p61 = scmp.ne.s32.totalorder %s50, %s51
      %p62 = scmp.eq.s32.totalorder %s21, 0
      %p63 = por %p61, %p62
      %p64 = scmp.ne.s32.totalorder %s50, %s51
      %p65 = scmp.eq.s32.totalorder %s22, 1
      %p66 = por %p64, %p65
      %p68 = scmp.ne.s32.totalorder %s51, %s67
      %p69 = scmp.eq.s32.totalorder %s22, 0
      %p70 = por %p68, %p69
      %s71 = ssub.s32 %s25, %s34
      %s72 = ssub.s32 %s24, %s38
      %s73 = sor.u32 %s71, %s72
      %p74 = scmp.eq.s32.totalorder %s73, 0
      %s76 = sadd.s32 %s75, 1
      %s77 = scalar_select %p74, %s75, %s76
      %p80 = pneg %p74
      %p81 = scmp.eq.s32.totalorder %s16, 1
      %p82 = por %p80, %p81
      %p83 = scmp.ne.s32.totalorder %s75, %s78
      %p84 = scmp.eq.s32.totalorder %s16, 0
      %p85 = por %p83, %p84
      %p86 = scmp.ne.s32.totalorder %s75, %s78
      %p87 = scmp.eq.s32.totalorder %s21, 1
      %p88 = por %p86, %p87
      %p89 = scmp.ne.s32.totalorder %s78, %s79
      %p90 = scmp.eq.s32.totalorder %s21, 0
      %p91 = por %p89, %p90
      %p92 = scmp.ne.s32.totalorder %s78, %s79
      %p93 = scmp.eq.s32.totalorder %s22, 1
      %p94 = por %p92, %p93
      %p96 = scmp.ne.s32.totalorder %s79, %s95
      %p97 = scmp.eq.s32.totalorder %s22, 0
      %p98 = por %p96, %p97
      %s99 = ssub.s32 %s24, %s38
      %p100 = scmp.eq.s32.totalorder %s99, 0
      %s102 = sadd.s32 %s101, 1
      %s103 = scalar_select %p100, %s101, %s102
      %p106 = pneg %p100
      %p107 = scmp.eq.s32.totalorder %s16, 1
      %p108 = por %p106, %p107
      %p109 = scmp.ne.s32.totalorder %s101, %s104
      %p110 = scmp.eq.s32.totalorder %s16, 0
      %p111 = por %p109, %p110
      %p112 = scmp.ne.s32.totalorder %s101, %s104
      %p113 = scmp.eq.s32.totalorder %s21, 1
      %p114 = por %p112, %p113
      %p115 = scmp.ne.s32.totalorder %s104, %s105
      %p116 = scmp.eq.s32.totalorder %s21, 0
      %p117 = por %p115, %p116
      %p118 = scmp.ne.s32.totalorder %s104, %s105
      %p119 = scmp.eq.s32.totalorder %s22, 1
      %p120 = por %p118, %p119
      %p122 = scmp.ne.s32.totalorder %s105, %s121
      %p123 = scmp.eq.s32.totalorder %s22, 0
      %p124 = por %p122, %p123
      %s125 = ssub.s32 %s23, %s42
      %s126 = ssub.s32 %s24, %s38
      %s127 = sor.u32 %s125, %s126
      %p128 = scmp.eq.s32.totalorder %s127, 0
      %s130 = sadd.s32 %s129, 1
      %s131 = scalar_select %p128, %s129, %s130
      %p134 = pneg %p128
      %p135 = scmp.eq.s32.totalorder %s16, 1
      %p136 = por %p134, %p135
      %p137 = scmp.ne.s32.totalorder %s129, %s132
      %p138 = scmp.eq.s32.totalorder %s16, 0
      %p139 = por %p137, %p138
      %p140 = scmp.ne.s32.totalorder %s129, %s132
      %p141 = scmp.eq.s32.totalorder %s21, 1
      %p142 = por %p140, %p141
      %p143 = scmp.ne.s32.totalorder %s132, %s133
      %p144 = scmp.eq.s32.totalorder %s21, 0
      %p145 = por %p143, %p144
      %p146 = scmp.ne.s32.totalorder %s132, %s133
      %p147 = scmp.eq.s32.totalorder %s22, 1
      %p148 = por %p146, %p147
      %p150 = scmp.ne.s32.totalorder %s133, %s149
      %p151 = scmp.eq.s32.totalorder %s22, 0
      %p152 = por %p150, %p151
      %p153 = scmp.le.s32.totalorder 1, %s16
      %p154 = scmp.lt.s32.totalorder %s16, 3
      %p155 = pnand %p153, %p154
      %p156 = pneg %p155
      // Predicated region
      $region9: #{tpu_custom_call.1} parent=5 // pred_check
        _
      $region10: #{tpu_custom_call.1} parent=5 // pred_check_branch
        %158 = sbr.rel (%p155) target = $region12
      $region11: #{tpu_custom_call.1} parent=5 // pred_region
        %s159 = ssub.s32 %s16, 1
        // Predicated region
        $region13: #{tpu_custom_call.1} parent=11 // pred_check
          %p160 = pneg %p63
        $region14: #{tpu_custom_call.1} parent=11 // pred_check_branch
          %162 = sbr.rel (%p160) target = $region16
        $region15: #{tpu_custom_call.1} parent=11 // pred_region
          %s163 = smul.u32 2, %s28
          %s165 = ssub.s32 256, 256
          %166 = vsyncadd [#allocation4], %s165
          %s167 = smul.addr %s26, 2
          %s168 = sadd.s32 %s163, %s167
          %s169 = smul.addr %s168, 128
          %s170 = scalar_lea.hbm %s0, %s169
          %s172 = sshll.u32 [#allocation3], 4
          %s173 = int_to_ptr.vmem [resolvable:$true] %s172
          %175 = dma.hbm_to_vmem [thread:$0]  %s170, 256, %s173, [#allocation4]
        $region16: #{tpu_custom_call.1} parent=11 // pred_fallthru
          _
      $region12: #{tpu_custom_call.1} parent=5 // pred_fallthru
        _
      %p176 = scmp.lt.s32.totalorder %s16, 2
      // Predicated region
      $region17: #{tpu_custom_call.1} parent=5 // pred_check
        %p177 = pneg %p176
      $region18: #{tpu_custom_call.1} parent=5 // pred_check_branch
        %179 = sbr.rel (%p177) target = $region20
      $region19: #{tpu_custom_call.1} parent=5 // pred_region
        // Predicated region
        $region21: #{tpu_custom_call.1} parent=19 // pred_check
          %p180 = pneg %p85
        $region22: #{tpu_custom_call.1} parent=19 // pred_check_branch
          %182 = sbr.rel (%p180) target = $region24
        $region23: #{tpu_custom_call.1} parent=19 // pred_region
          %s183 = sand.u32 %s75, 1
          %s184 = scalar_lea.sflag [#allocation7], %s183
          %s185 = sand.u32 %s75, 1
          %s186 = smul.addr %s185, 768
          %s187 = scalar_lea.vmem [#allocation6], %s186
          %s188 = smul.u32 32, %s25
          %s189 = smul.u32 3, %s24
          %s191 = ssub.s32 12288, 12288
          %192 = vsyncadd %s184, %s191
          %s193 = smul.addr %s188, 6
          %s194 = sadd.s32 %s189, %s193
          %s195 = smul.addr %s194, 128
          %s196 = scalar_lea.hbm %s1, %s195
          %s197 = sshll.u32 %s187, 4
          %s198 = int_to_ptr.vmem [resolvable:$true] %s197
          %203 = dma.hbm_to_vmem [thread:$0]  %s196, 12288, %s198, %s184, 768, 384, 24
        $region24: #{tpu_custom_call.1} parent=19 // pred_fallthru
          _
        // Predicated region
        $region25: #{tpu_custom_call.1} parent=19 // pred_check
          %p204 = pneg %p111
        $region26: #{tpu_custom_call.1} parent=19 // pred_check_branch
          %206 = sbr.rel (%p204) target = $region28
        $region27: #{tpu_custom_call.1} parent=19 // pred_region
          %s207 = smul.u32 3, %s24
          %p208 = scmp.lt.s32.totalorder %s207, 5
          %s209 = scalar_select %p208, %s207, 5
          %s210 = scalar_lea.vmem %s2, %s209
          %s211 = smul.u32 3, %s24
        $region28: #{tpu_custom_call.1} parent=19 // pred_fallthru
          _
      $region20: #{tpu_custom_call.1} parent=5 // pred_fallthru
        _
      %p212 = scmp.le.s32.totalorder 1, %s16
      %p213 = scmp.lt.s32.totalorder %s16, 3
      %p214 = pnand %p212, %p213
      %p215 = pneg %p214
      // Predicated region
      $region29: #{tpu_custom_call.1} parent=5 // pred_check
        _
      $region30: #{tpu_custom_call.1} parent=5 // pred_check_branch
        %217 = sbr.rel (%p214) target = $region32
      $region31: #{tpu_custom_call.1} parent=5 // pred_region
        %s218 = ssub.s32 %s16, 1
        // Predicated region
        $region33: #{tpu_custom_call.1} parent=31 // pred_check
          %p219 = pneg %p63
        $region34: #{tpu_custom_call.1} parent=31 // pred_check_branch
          %221 = sbr.rel (%p219) target = $region36
        $region35: #{tpu_custom_call.1} parent=31 // pred_region
          %222 = dma.done [#allocation4], 256
        $region36: #{tpu_custom_call.1} parent=31 // pred_fallthru
          _
        %s223 = sand.u32 %s78, 1
        %s224 = scalar_lea.sflag [#allocation7], %s223
        %s225 = sand.u32 %s78, 1
        %s226 = smul.addr %s225, 768
        %s227 = scalar_lea.vmem [#allocation6], %s226
        // Predicated region
        $region37: #{tpu_custom_call.1} parent=31 // pred_check
          %p228 = pneg %p91
        $region38: #{tpu_custom_call.1} parent=31 // pred_check_branch
          %230 = sbr.rel (%p228) target = $region40
        $region39: #{tpu_custom_call.1} parent=31 // pred_region
          %231 = dma.done %s224, 12288
        $region40: #{tpu_custom_call.1} parent=31 // pred_fallthru
          _
        %p232 = pneg %p63
        %p233 = pneg %p60
        %s234 = sand.u32 %s78, 1
        %s235 = scalar_lea.sflag [#allocation7], %s234
        %s236 = sand.u32 %s78, 1
        %s237 = smul.addr %s236, 768
        %s238 = scalar_lea.vmem [#allocation6], %s237
        %p239 = pneg %p91
        %p240 = pneg %p88
        %s241 = smul.u32 3, %s27
        %p242 = scmp.lt.s32.totalorder %s241, 5
        %s243 = scalar_select %p242, %s241, 5
        %s244 = scalar_lea.vmem %s2, %s243
        %p245 = pneg %p117
        %p246 = pneg %p114
        %p247 = pneg %p145
        %p248 = pneg %p142
        %s249 = sand.u32 %s132, 1
        %s250 = scalar_lea.sflag [#allocation5], %s249
        %s251 = sand.u32 %s132, 1
        %s252 = smul.addr %s251, 24
        %s253 = scalar_lea.vmem [#allocation8], %s252
        %s254 = smul.u32 2, %s28
        %s255 = smul.u32 32, %s28
        %s256 = smul.u32 3, %s27
        %s257 = smul.u32 3, %s27
        %p258 = scmp.lt.s32.totalorder %s257, 5
        %s259 = scalar_select %p258, %s257, 5
        %s260 = scalar_lea.vmem %s2, %s259
        %s261 = smul.u32 3, %s27
        %s262 = smul.u32 3, %s27
        %p263 = scmp.eq.s32.totalorder %s28, 0
        // Predicated region
        $region41: #{tpu_custom_call.1} parent=31 // pred_check
          %p264 = pneg %p263
        $region42: #{tpu_custom_call.1} parent=31 // pred_check_branch
          %266 = sbr.rel (%p264) target = $region44
        $region43: #{tpu_custom_call.1} parent=31 // pred_region
          %267 = vst [vmem:[#allocation2] sm:$0xff] 0.0
          %268 = vst [vmem:[#allocation2 + $0x8] sm:$0xff] 0.0
          %269 = vst [vmem:[#allocation2 + $0x10] sm:$0xff] 0.0
        $region44: #{tpu_custom_call.1} parent=31 // pred_fallthru
          _
        %v270 = vld [vmem:[#allocation3] sm:$0xff]
        %v271 = vld [vmem:[#allocation3 + $0x8] sm:$0xff]
        %v272 = vxor.u32 %v270, 2147483648
        %v273 = vxor.u32 %v271, 2147483648
        %v274 = vmul.f32 %v272, 1.442695
        %v275 = vpow.pop %v274
        %v276 = vmul.f32 %v273, 1.442695
        %v277 = vpow.pop %v276
        %v278 = vadd.f32 %v275, 1.0
        %v279 = vadd.f32 %v277, 1.0
        %v280 = vrcp.pop %v278
        %v281 = vmul.f32 1.0, %v280
        %v282 = vrcp.pop %v279
        %v283 = vmul.f32 1.0, %v282
        %v284 = vmul.f32 %v270, %v281
        %v285 = vmul.f32 %v271, %v283
        %v286 = vld [vmem:[#allocation2] sm:$0xff]
        %v287 = vld [vmem:[#allocation2 + $0x8] sm:$0xff]
        %v288 = vld [vmem:[#allocation2 + $0x10] sm:$0xff]
        %v289 = vld [vmem:[%s227] sm:$0xff]
        %v290 = vld [vmem:[%s227 + $0x8] sm:$0xff]
        %v291 = vld [vmem:[%s227 + $0x10] sm:$0xff]
        %v292 = vld [vmem:[%s227 + $0x18] sm:$0xff]
        %v293 = vld [vmem:[%s227 + $0x20] sm:$0xff]
        %v294 = vld [vmem:[%s227 + $0x28] sm:$0xff]
        %v295 = vld [vmem:[%s227 + $0x30] sm:$0xff]
        %v296 = vld [vmem:[%s227 + $0x38] sm:$0xff]
        %v297 = vld [vmem:[%s227 + $0x40] sm:$0xff]
        %v298 = vld [vmem:[%s227 + $0x48] sm:$0xff]
        %v299 = vld [vmem:[%s227 + $0x50] sm:$0xff]
        %v300 = vld [vmem:[%s227 + $0x58] sm:$0xff]
        %v301 = vld [vmem:[%s227 + $0x60] sm:$0xff]
        %v302 = vld [vmem:[%s227 + $0x68] sm:$0xff]
        %v303 = vld [vmem:[%s227 + $0x70] sm:$0xff]
        %v304 = vld [vmem:[%s227 + $0x78] sm:$0xff]
        %v305 = vld [vmem:[%s227 + $0x80] sm:$0xff]
        %v306 = vld [vmem:[%s227 + $0x88] sm:$0xff]
        %v307 = vld [vmem:[%s227 + $0x90] sm:$0xff]
        %v308 = vld [vmem:[%s227 + $0x98] sm:$0xff]
        %v309 = vld [vmem:[%s227 + $0xa0] sm:$0xff]
        %v310 = vld [vmem:[%s227 + $0xa8] sm:$0xff]
        %v311 = vld [vmem:[%s227 + $0xb0] sm:$0xff]
        %v312 = vld [vmem:[%s227 + $0xb8] sm:$0xff]
        %v313 = vld [vmem:[%s227 + $0xc0] sm:$0xff]
        %v314 = vld [vmem:[%s227 + $0xc8] sm:$0xff]
        %v315 = vld [vmem:[%s227 + $0xd0] sm:$0xff]
        %v316 = vld [vmem:[%s227 + $0xd8] sm:$0xff]
        %v317 = vld [vmem:[%s227 + $0xe0] sm:$0xff]
        %v318 = vld [vmem:[%s227 + $0xe8] sm:$0xff]
        %v319 = vld [vmem:[%s227 + $0xf0] sm:$0xff]
        %v320 = vld [vmem:[%s227 + $0xf8] sm:$0xff]
        %v321 = vld [vmem:[%s227 + $0x100] sm:$0xff]
        %v322 = vld [vmem:[%s227 + $0x108] sm:$0xff]
        %v323 = vld [vmem:[%s227 + $0x110] sm:$0xff]
        %v324 = vld [vmem:[%s227 + $0x118] sm:$0xff]
        %v325 = vld [vmem:[%s227 + $0x120] sm:$0xff]
        %v326 = vld [vmem:[%s227 + $0x128] sm:$0xff]
        %v327 = vld [vmem:[%s227 + $0x130] sm:$0xff]
        %v328 = vld [vmem:[%s227 + $0x138] sm:$0xff]
        %v329 = vld [vmem:[%s227 + $0x140] sm:$0xff]
        %v330 = vld [vmem:[%s227 + $0x148] sm:$0xff]
        %v331 = vld [vmem:[%s227 + $0x150] sm:$0xff]
        %v332 = vld [vmem:[%s227 + $0x158] sm:$0xff]
        %v333 = vld [vmem:[%s227 + $0x160] sm:$0xff]
        %v334 = vld [vmem:[%s227 + $0x168] sm:$0xff]
        %v335 = vld [vmem:[%s227 + $0x170] sm:$0xff]
        %v336 = vld [vmem:[%s227 + $0x178] sm:$0xff]
        %v337 = vld [vmem:[%s227 + $0x180] sm:$0xff]
        %v338 = vld [vmem:[%s227 + $0x188] sm:$0xff]
        %v339 = vld [vmem:[%s227 + $0x190] sm:$0xff]
        %v340 = vld [vmem:[%s227 + $0x198] sm:$0xff]
        %v341 = vld [vmem:[%s227 + $0x1a0] sm:$0xff]
        %v342 = vld [vmem:[%s227 + $0x1a8] sm:$0xff]
        %v343 = vld [vmem:[%s227 + $0x1b0] sm:$0xff]
        %v344 = vld [vmem:[%s227 + $0x1b8] sm:$0xff]
        %v345 = vld [vmem:[%s227 + $0x1c0] sm:$0xff]
        %v346 = vld [vmem:[%s227 + $0x1c8] sm:$0xff]
        %v347 = vld [vmem:[%s227 + $0x1d0] sm:$0xff]
        %v348 = vld [vmem:[%s227 + $0x1d8] sm:$0xff]
        %v349 = vld [vmem:[%s227 + $0x1e0] sm:$0xff]
        %v350 = vld [vmem:[%s227 + $0x1e8] sm:$0xff]
        %v351 = vld [vmem:[%s227 + $0x1f0] sm:$0xff]
        %v352 = vld [vmem:[%s227 + $0x1f8] sm:$0xff]
        %v353 = vld [vmem:[%s227 + $0x200] sm:$0xff]
        %v354 = vld [vmem:[%s227 + $0x208] sm:$0xff]
        %v355 = vld [vmem:[%s227 + $0x210] sm:$0xff]
        %v356 = vld [vmem:[%s227 + $0x218] sm:$0xff]
        %v357 = vld [vmem:[%s227 + $0x220] sm:$0xff]
        %v358 = vld [vmem:[%s227 + $0x228] sm:$0xff]
        %v359 = vld [vmem:[%s227 + $0x230] sm:$0xff]
        %v360 = vld [vmem:[%s227 + $0x238] sm:$0xff]
        %v361 = vld [vmem:[%s227 + $0x240] sm:$0xff]
        %v362 = vld [vmem:[%s227 + $0x248] sm:$0xff]
        %v363 = vld [vmem:[%s227 + $0x250] sm:$0xff]
        %v364 = vld [vmem:[%s227 + $0x258] sm:$0xff]
        %v365 = vld [vmem:[%s227 + $0x260] sm:$0xff]
        %v366 = vld [vmem:[%s227 + $0x268] sm:$0xff]
        %v367 = vld [vmem:[%s227 + $0x270] sm:$0xff]
        %v368 = vld [vmem:[%s227 + $0x278] sm:$0xff]
        %v369 = vld [vmem:[%s227 + $0x280] sm:$0xff]
        %v370 = vld [vmem:[%s227 + $0x288] sm:$0xff]
        %v371 = vld [vmem:[%s227 + $0x290] sm:$0xff]
        %v372 = vld [vmem:[%s227 + $0x298] sm:$0xff]
        %v373 = vld [vmem:[%s227 + $0x2a0] sm:$0xff]
        %v374 = vld [vmem:[%s227 + $0x2a8] sm:$0xff]
        %v375 = vld [vmem:[%s227 + $0x2b0] sm:$0xff]
        %v376 = vld [vmem:[%s227 + $0x2b8] sm:$0xff]
        %v377 = vld [vmem:[%s227 + $0x2c0] sm:$0xff]
        %v378 = vld [vmem:[%s227 + $0x2c8] sm:$0xff]
        %v379 = vld [vmem:[%s227 + $0x2d0] sm:$0xff]
        %v380 = vld [vmem:[%s227 + $0x2d8] sm:$0xff]
        %v381 = vld [vmem:[%s227 + $0x2e0] sm:$0xff]
        %v382 = vld [vmem:[%s227 + $0x2e8] sm:$0xff]
        %v383 = vld [vmem:[%s227 + $0x2f0] sm:$0xff]
        %v384 = vld [vmem:[%s227 + $0x2f8] sm:$0xff]
        %385 = vmatprep.subr.mxu0 %v290
        %386 = vmatpush1.msra.mxu0 %v289
        %387 = vmatprep.subr.mxu0 %v293
        %388 = vmatpush1.msra.mxu0 %v292
        %389 = vmatprep.subr.mxu0 %v296
        %390 = vmatpush1.msra.mxu0 %v295
        %391 = vmatprep.subr.mxu0 %v299
        %392 = vmatpush1.msra.mxu0 %v298
        %393 = vmatprep.subr.mxu0 %v302
        %394 = vmatpush1.msra.mxu0 %v301
        %395 = vmatprep.subr.mxu0 %v305
        %396 = vmatpush1.msra.mxu0 %v304
        %397 = vmatprep.subr.mxu0 %v308
        %398 = vmatpush1.msra.mxu0 %v307
        %399 = vmatprep.subr.mxu0 %v311
        %400 = vmatpush1.msra.mxu0 %v310
        %401 = vmatprep.subr.mxu0 %v314
        %402 = vmatpush1.msra.mxu0 %v313
        %403 = vmatprep.subr.mxu0 %v317
        %404 = vmatpush1.msra.mxu0 %v316
        %405 = vmatprep.subr.mxu0 %v320
        %406 = vmatpush1.msra.mxu0 %v319
        %407 = vmatprep.subr.mxu0 %v323
        %408 = vmatpush1.msra.mxu0 %v322
        %409 = vmatprep.subr.mxu0 %v326
        %410 = vmatpush1.msra.mxu0 %v325
        %411 = vmatprep.subr.mxu0 %v329
        %412 = vmatpush1.msra.mxu0 %v328
        %413 = vmatprep.subr.mxu0 %v332
        %414 = vmatpush1.msra.mxu0 %v331
        %415 = vmatprep.subr.mxu0 %v335
        %416 = vmatpush1.msra.mxu0 %v334
        %417 = vmatprep.subr.mxu0 %v338
        %418 = vmatpush1.msra.mxu0 %v337
        %419 = vmatprep.subr.mxu0 %v341
        %420 = vmatpush1.msra.mxu0 %v340
        %421 = vmatprep.subr.mxu0 %v344
        %422 = vmatpush1.msra.mxu0 %v343
        %423 = vmatprep.subr.mxu0 %v347
        %424 = vmatpush1.msra.mxu0 %v346
        %425 = vmatprep.subr.mxu0 %v350
        %426 = vmatpush1.msra.mxu0 %v349
        %427 = vmatprep.subr.mxu0 %v353
        %428 = vmatpush1.msra.mxu0 %v352
        %429 = vmatprep.subr.mxu0 %v356
        %430 = vmatpush1.msra.mxu0 %v355
        %431 = vmatprep.subr.mxu0 %v359
        %432 = vmatpush1.msra.mxu0 %v358
        %433 = vmatprep.subr.mxu0 %v362
        %434 = vmatpush1.msra.mxu0 %v361
        %435 = vmatprep.subr.mxu0 %v365
        %436 = vmatpush1.msra.mxu0 %v364
        %437 = vmatprep.subr.mxu0 %v368
        %438 = vmatpush1.msra.mxu0 %v367
        %439 = vmatprep.subr.mxu0 %v371
        %440 = vmatpush1.msra.mxu0 %v370
        %441 = vmatprep.subr.mxu0 %v374
        %442 = vmatpush1.msra.mxu0 %v373
        %443 = vmatprep.subr.mxu0 %v377
        %444 = vmatpush1.msra.mxu0 %v376
        %445 = vmatprep.subr.mxu0 %v380
        %446 = vmatpush1.msra.mxu0 %v379
        %447 = vmatprep.subr.mxu0 %v383
        %448 = vmatpush1.msra.mxu0 %v382
        %449 = vmatprep.mubr.f32.mxu0 %v285
        %450 = vmatmul.mubr.f32.gmra.mrb[0].mxu0 %v284
        %v451 = vpop.f32.mrb[0].mxu0
        %v452 = vadd.f32 0.0, %v451
        %v453 = vpop.f32.mrb[0].mxu0
        %v454 = vadd.f32 0.0, %v453
        %455 = vdwg.mxu0
        %456 = vmatprep.subr.mxu0 0.0
        %457 = vmatpush1.msra.mxu0 %v291
        %458 = vmatprep.subr.mxu0 0.0
        %459 = vmatpush1.msra.mxu0 %v294
        %460 = vmatprep.subr.mxu0 0.0
        %461 = vmatpush1.msra.mxu0 %v297
        %462 = vmatprep.subr.mxu0 0.0
        %463 = vmatpush1.msra.mxu0 %v300
        %464 = vmatprep.subr.mxu0 0.0
        %465 = vmatpush1.msra.mxu0 %v303
        %466 = vmatprep.subr.mxu0 0.0
        %467 = vmatpush1.msra.mxu0 %v306
        %468 = vmatprep.subr.mxu0 0.0
        %469 = vmatpush1.msra.mxu0 %v309
        %470 = vmatprep.subr.mxu0 0.0
        %471 = vmatpush1.msra.mxu0 %v312
        %472 = vmatprep.subr.mxu0 0.0
        %473 = vmatpush1.msra.mxu0 %v315
        %474 = vmatprep.subr.mxu0 0.0
        %475 = vmatpush1.msra.mxu0 %v318
        %476 = vmatprep.subr.mxu0 0.0
        %477 = vmatpush1.msra.mxu0 %v321
        %478 = vmatprep.subr.mxu0 0.0
        %479 = vmatpush1.msra.mxu0 %v324
        %480 = vmatprep.subr.mxu0 0.0
        %481 = vmatpush1.msra.mxu0 %v327
        %482 = vmatprep.subr.mxu0 0.0
        %483 = vmatpush1.msra.mxu0 %v330
        %484 = vmatprep.subr.mxu0 0.0
        %485 = vmatpush1.msra.mxu0 %v333
        %486 = vmatprep.subr.mxu0 0.0
        %487 = vmatpush1.msra.mxu0 %v336
        %488 = vmatprep.subr.mxu0 0.0
        %489 = vmatpush1.msra.mxu0 %v339
        %490 = vmatprep.subr.mxu0 0.0
        %491 = vmatpush1.msra.mxu0 %v342
        %492 = vmatprep.subr.mxu0 0.0
        %493 = vmatpush1.msra.mxu0 %v345
        %494 = vmatprep.subr.mxu0 0.0
        %495 = vmatpush1.msra.mxu0 %v348
        %496 = vmatprep.subr.mxu0 0.0
        %497 = vmatpush1.msra.mxu0 %v351
        %498 = vmatprep.subr.mxu0 0.0
        %499 = vmatpush1.msra.mxu0 %v354
        %500 = vmatprep.subr.mxu0 0.0
        %501 = vmatpush1.msra.mxu0 %v357
        %502 = vmatprep.subr.mxu0 0.0
        %503 = vmatpush1.msra.mxu0 %v360
        %504 = vmatprep.subr.mxu0 0.0
        %505 = vmatpush1.msra.mxu0 %v363
        %506 = vmatprep.subr.mxu0 0.0
        %507 = vmatpush1.msra.mxu0 %v366
        %508 = vmatprep.subr.mxu0 0.0
        %509 = vmatpush1.msra.mxu0 %v369
        %510 = vmatprep.subr.mxu0 0.0
        %511 = vmatpush1.msra.mxu0 %v372
        %512 = vmatprep.subr.mxu0 0.0
        %513 = vmatpush1.msra.mxu0 %v375
        %514 = vmatprep.subr.mxu0 0.0
        %515 = vmatpush1.msra.mxu0 %v378
        %516 = vmatprep.subr.mxu0 0.0
        %517 = vmatpush1.msra.mxu0 %v381
        %518 = vmatprep.subr.mxu0 0.0
        %519 = vmatpush1.msra.mxu0 %v384
        %520 = vmatprep.mubr.f32.mxu0 %v285
        %521 = vmatmul.mubr.f32.gmra.mrb[0].mxu0 %v284
        %v522 = vpop.f32.mrb[0].mxu0
        %v523 = vadd.f32 0.0, %v522
        %v524 = vpop.f32.mrb[0].mxu0
        %525 = vdwg.mxu0
        %v526 = vadd.f32 %v286, %v452
        %v527 = vadd.f32 %v287, %v454
        %v528 = vadd.f32 %v288, %v523
        %529 = vst [vmem:[#allocation2] sm:$0xff] %v526
        %530 = vst [vmem:[#allocation2 + $0x8] sm:$0xff] %v527
        %531 = vst [vmem:[#allocation2 + $0x10] sm:$0xff] %v528
        // Predicated region
        $region45: #{tpu_custom_call.1} parent=31 // pred_check
          %p532 = pneg %p263
        $region46: #{tpu_custom_call.1} parent=31 // pred_check_branch
          %534 = sbr.rel (%p532) target = $region48
        $region47: #{tpu_custom_call.1} parent=31 // pred_region
          %v535 = vld [vmem:[#allocation2] sm:$0xff]
          %v536 = vld [vmem:[#allocation2 + $0x8] sm:$0xff]
          %v537 = vld [vmem:[#allocation2 + $0x10] sm:$0xff]
          %v538 = vld [vmem:[%s260] sm:$0x7]
          %v540 = vlaneseq
          %v541 = vshrl.u32 %v540, 7
          %v542 = vsub.s32 0, %v541
          %v543 = vrot.slane %v538, %v542
          %v544 = vlaneseq
          %v545 = vshrl.u32 %v544, 7
          %v546 = vsub.s32 1, %v545
          %v547 = vrot.slane %v538, %v546
          %v548 = vlaneseq
          %v549 = vshrl.u32 %v548, 7
          %v550 = vsub.s32 2, %v549
          %v551 = vrot.slane %v538, %v550
          %v555 = vadd.f32 %v535, %v543
          %v556 = vadd.f32 %v536, %v547
          %v557 = vadd.f32 %v537, %v551
          %558 = vst [vmem:[%s253] sm:$0xff] %v555
          %559 = vst [vmem:[%s253 + $0x8] sm:$0xff] %v556
          %560 = vst [vmem:[%s253 + $0x10] sm:$0xff] %v557
        $region48: #{tpu_custom_call.1} parent=31 // pred_fallthru
          _
        %s561 = sand.u32 %s132, 1
        %s562 = scalar_lea.sflag [#allocation5], %s561
        %s563 = sand.u32 %s132, 1
        %s564 = smul.addr %s563, 24
        %s565 = scalar_lea.vmem [#allocation8], %s564
        // Predicated region
        $region49: #{tpu_custom_call.1} parent=31 // pred_check
          %p566 = pneg %p142
        $region50: #{tpu_custom_call.1} parent=31 // pred_check_branch
          %568 = sbr.rel (%p566) target = $region52
        $region51: #{tpu_custom_call.1} parent=31 // pred_region
          %s569 = smul.u32 3, %s27
          %s571 = ssub.s32 384, 384
          %572 = vsyncadd %s562, %s571
          %s573 = smul.addr %s26, 6
          %s574 = sadd.s32 %s569, %s573
          %s575 = smul.addr %s574, 128
          %s576 = scalar_lea.hbm %s3, %s575
          %s578 = sshll.u32 %s565, 4
          %s579 = int_to_ptr.vmem [resolvable:$true] %s578
          %581 = dma.vmem_to_hbm [thread:$0]  %s579, 384, %s576, %s562
        $region52: #{tpu_custom_call.1} parent=31 // pred_fallthru
          _
      $region32: #{tpu_custom_call.1} parent=5 // pred_fallthru
        _
      %p582 = scmp.le.s32.totalorder 2, %s16
      // Predicated region
      $region53: #{tpu_custom_call.1} parent=5 // pred_check
        %p583 = pneg %p582
      $region54: #{tpu_custom_call.1} parent=5 // pred_check_branch
        %585 = sbr.rel (%p583) target = $region56
      $region55: #{tpu_custom_call.1} parent=5 // pred_region
        %s586 = ssub.s32 %s16, 2
        // Predicated region
        $region57: #{tpu_custom_call.1} parent=55 // pred_check
          %p587 = pneg %p148
        $region58: #{tpu_custom_call.1} parent=55 // pred_check_branch
          %589 = sbr.rel (%p587) target = $region60
        $region59: #{tpu_custom_call.1} parent=55 // pred_region
          %s590 = sand.u32 %s133, 1
          %s591 = scalar_lea.sflag [#allocation5], %s590
          %s592 = sand.u32 %s133, 1
          %s593 = smul.addr %s592, 24
          %s594 = scalar_lea.vmem [#allocation8], %s593
          %595 = dma.done %s591, 384
        $region60: #{tpu_custom_call.1} parent=55 // pred_fallthru
          _
      $region56: #{tpu_custom_call.1} parent=5 // pred_fallthru
        _
    $region6: #{tpu_custom_call.1} parent=1 // loop_footer
      %s20 = sadd.s32 1, %s16
    $region7: #{tpu_custom_call.1} parent=1 // loop_footer_branch
      %15 = sbr.rel target = $region3
    $region8: #{tpu_custom_call.1} parent=1 // loop_exit
      _
    %596 = vsyncpa [#allocation4], 1
    %s597 = scalar_lea.sflag [#allocation4], 1
    %598 = vsyncpa %s597, 1
    %599 = vsyncpa [#allocation7], 1
    %s600 = scalar_lea.sflag [#allocation7], 1
    %601 = vsyncpa %s600, 1
    %602 = vsyncpa [#allocation5], 1
    %s603 = scalar_lea.sflag [#allocation5], 1
    %604 = vsyncpa %s603, 1

</llo_original>
